<compile_context>
chip_gen: v7x
topology: tpu7x:2x2x1
jax: 0.10.0
libtpu: 0.0.40
codegen_flags: <defaults>
</compile_context>

<pallas_src>
import math

import jax
import jax.numpy as jnp
from jax.experimental import pallas as pl
from jax.experimental.pallas import tpu as pltpu


# --------------------------------------------------------------------------- #
# Pallas kernel: per-frame reference projection, transposed (lane-dense) layout
#   out[b, f, :, tok_tile] = w_stack[f] @ x[b, f, :, tok_tile] + b_stack[f]
# --------------------------------------------------------------------------- #
def _ref_proj_kernel(w_ref, b_ref, x_ref, o_ref):
    # w_ref: (1, 2, C)        per-frame Linear weight (rows = 2 output coords)
    # b_ref: (1, 2, 1)        per-frame bias (column vector)
    # x_ref: (1, 1, C, TILE)  tokens, channel-major (straight from NCHW memory)
    # o_ref: (1, 1, 2, TILE)  lane-dense output (tokens on the lane axis)
    w = w_ref[0, :, :]                       # (2, C)
    x = x_ref[0, 0, :, :]                    # (C, TILE)
    b = b_ref[0, :, :]                       # (2, 1)
    o_ref[0, 0, :, :] = jnp.dot(w, x, preferred_element_type=jnp.float32) + b


def _pick_token_tile(hw, max_tile):
    """Largest token tile that keeps blocks small enough for v7x VMEM while
    staying a multiple of 128 (lane-dense) or equal to the full row."""
    if hw <= max_tile:
        return hw
    t = (max_tile // 128) * 128
    while t >= 128:
        if hw % t == 0:
            return t
        t -= 128
    # TODO(synk): awkward hw with no multiple-of-128 divisor <= max_tile;
    # fall back to one full-row block (may need a larger vmem limit at extreme sizes).
    return hw


def reference_projection(prev_tokens, w_stack, b_stack, *, max_tile=2048):
    """prev_tokens: (bs, n_prev_frames, C, HW) channel-major (free reshape of NCHW).
    Returns (bs, n_prev_frames, 2, HW) float32."""
    bs, nf, C, HW = prev_tokens.shape
    assert w_stack.shape == (nf, 2, C) and b_stack.shape == (nf, 2, 1)
    tile = _pick_token_tile(HW, max_tile)
    grid = (bs, nf, HW // tile)
    return pl.pallas_call(
        _ref_proj_kernel,
        out_shape=jax.ShapeDtypeStruct((bs, nf, 2, HW), jnp.float32),
        grid_spec=pltpu.PrefetchScalarGridSpec(
            num_scalar_prefetch=0,
            grid=grid,
            in_specs=[
                # weights / bias: block index depends only on the frame axis ->
                # stays VMEM-resident across batch and token-tile steps.
                pl.BlockSpec((1, 2, C), lambda b, f, t: (f, 0, 0)),
                pl.BlockSpec((1, 2, 1), lambda b, f, t: (f, 0, 0)),
                pl.BlockSpec((1, 1, C, tile), lambda b, f, t: (b, f, 0, t)),
            ],
            out_specs=pl.BlockSpec((1, 1, 2, tile), lambda b, f, t: (b, f, 0, t)),
        ),
        compiler_params=pltpu.CompilerParams(
            # All axes independent -> megacore sharding on v7x, no-op elsewhere.
            dimension_semantics=("parallel", "parallel", "parallel"),
            vmem_limit_bytes=32 * 1024 * 1024,
        ),
    )(w_stack, b_stack, prev_tokens)


# --------------------------------------------------------------------------- #
# Forward pass (1 Pallas kernel per pyramid level; everything else is cheap
# XLA glue or compile-time constants)
# --------------------------------------------------------------------------- #
def deformable_prev_freeze_temporal_v2_forward(params, cur_image_feature, prev_image_feature):
    level_embeds = params["level_embeds"]          # (T, C)
    T, C = level_embeds.shape                      # temporal frames, embed dims
    num_feats = C // 2                             # SinePositionalEncoding num_feats

    # Constant-folded sine-pos + level-embed table.  With the module's all-ones
    # mask, not_mask == 0 -> y_embed == x_embed == 0 -> encoding is the constant
    # pattern [sin(0), cos(0), ...] = [0, 1, 0, 1, ...] per half (offset=0).
    c_idx = jnp.arange(C)
    pos_const = ((c_idx % num_feats) % 2).astype(jnp.float32)       # (C,)
    lvl_pos_table = level_embeds + pos_const[None, :]               # (T, C)
    # NOTE: lvl_pos_embed_flatten == broadcast of lvl_pos_table over (bs, T*hw);
    # it is NOT materialized here (decoder is identity / None).

    w_stack = params["ref_w_stack"]                # (2, 2, C): [layer_, layer__]
    b_stack = params["ref_b_stack"]                # (2, 2, 1)

    bs = cur_image_feature[0].shape[0]
    encoded_mlvl_feats, aux = [], []
    for level in range(len(cur_image_feature)):
        cur = cur_image_feature[level]             # (bs, 1, C, H, W)
        prev = prev_image_feature[level]           # (bs, T-1, C, H, W)
        H, W = cur.shape[-2:]
        hw = H * W
        n_prev = prev.shape[1]                     # == T - 1 == 2

        # NOTE: F.interpolate(feat, feat.shape[-2:]) for feat_idx != 0 is a
        # same-size nearest resize -> identity, so it is dropped.

        # --- Pallas: reference projections, reading straight from the NCHW
        #     prev-frame tensor (free reshape -> channel-major (C, hw) tokens).
        prev_tokens = prev.reshape(bs, n_prev, C, hw)
        ref_prev = reference_projection(prev_tokens, w_stack, b_stack)  # (bs, n_prev, 2, hw)

        # masks are all True -> get_valid_ratio is exactly 0 (faithful to torch).
        valid_ratios = jnp.zeros((bs, T, 2), jnp.float32)

        # get_reference_points, lvl-0 path (division by 0 -> +inf, as in torch).
        ref_y, ref_x = jnp.meshgrid(
            jnp.linspace(0.5, H - 0.5, H, dtype=jnp.float32),
            jnp.linspace(0.5, W - 0.5, W, dtype=jnp.float32), indexing="ij")
        ref_y0 = ref_y.reshape(-1)[None] / (valid_ratios[:, None, 0, 1] * H)
        ref_x0 = ref_x.reshape(-1)[None] / (valid_ratios[:, None, 0, 0] * W)
        ref0 = jnp.stack([ref_x0, ref_y0], -1)                      # (bs, hw, 2)
        refs = [ref0] + [jnp.transpose(ref_prev[:, f], (0, 2, 1))   # tiny (hw,2) transposes
                         for f in range(n_prev)]
        reference_points = jnp.stack(refs, axis=2)                  # (bs, hw, T, 2)

        spatial_shapes = jnp.array([[H, W]] * T, jnp.int32)
        level_start_index = jnp.concatenate(
            [jnp.zeros((1,), jnp.int32),
             jnp.cumsum(spatial_shapes.prod(1))[:-1].astype(jnp.int32)])

        # Decoder is identity on the first hw tokens (the current frame), so
        # target_memory is exactly the raw current-frame NCHW feature.
        # TODO(synk): real decoder comes from an external config (None here).
        encoded_mlvl_feats.append(cur[:, 0])

        aux.append({
            "lvl_pos_embed": lvl_pos_table,          # (T, C); flatten = broadcast
            "spatial_shapes": spatial_shapes,        # (T, 2)
            "level_start_index": level_start_index,  # (T,)
            "valid_ratios": valid_ratios,            # (bs, T, 2) == 0 (all-ones mask)
            "reference_points": reference_points,    # (bs, hw, T, 2)
        })
    return encoded_mlvl_feats, aux


# --------------------------------------------------------------------------- #
# Driver
# --------------------------------------------------------------------------- #
if __name__ == "__main__":
    bs = 2
    embed_dims = 32                 # positional-encoding num_feats = 16
    num_feature_levels = 3          # temporal frames: cur gives 1, prev gives 2
    spatial = [(16, 16), (16, 8), (8, 16), (8, 8), (8, 8)]   # 5 pyramid levels

    key = jax.random.PRNGKey(0)
    keys = jax.random.split(key, 5 + 2 * len(spatial))

    # deterministic parameter init (shapes from __init__)
    level_embeds = jax.random.normal(keys[0], (num_feature_levels, embed_dims), jnp.float32)
    bound = 1.0 / math.sqrt(embed_dims)
    ref_w1 = jax.random.uniform(keys[1], (2, embed_dims), jnp.float32, -bound, bound)
    ref_b1 = jax.random.uniform(keys[2], (2,), jnp.float32, -bound, bound)
    ref_w2 = jax.random.uniform(keys[3], (2, embed_dims), jnp.float32, -bound, bound)
    ref_b2 = jax.random.uniform(keys[4], (2,), jnp.float32, -bound, bound)
    params = {
        "level_embeds": level_embeds,
        "ref_w_stack": jnp.stack([ref_w1, ref_w2], axis=0),              # (2, 2, C)
        "ref_b_stack": jnp.stack([ref_b1, ref_b2], axis=0)[..., None],   # (2, 2, 1)
    }

    cur_image_feature, prev_image_feature = [], []
    for li, (H, W) in enumerate(spatial):
        cur_image_feature.append(
            jax.random.normal(keys[5 + 2 * li], (bs, 1, embed_dims, H, W), jnp.float32))
        prev_image_feature.append(
            jax.random.normal(keys[6 + 2 * li], (bs, 2, embed_dims, H, W), jnp.float32))

    out, aux = deformable_prev_freeze_temporal_v2_forward(
        params, cur_image_feature, prev_image_feature)
    jax.block_until_ready((out, aux))

    # sanity + numerical checks against a pure-JAX reference of the Pallas path
    for li, (H, W) in enumerate(spatial):
        hw = H * W
        a = aux[li]
        assert out[li].shape == (bs, embed_dims, H, W)
        assert bool(jnp.all(out[li] == cur_image_feature[li][:, 0]))
        assert a["reference_points"].shape == (bs, hw, num_feature_levels, 2)
        assert a["lvl_pos_embed"].shape == (num_feature_levels, embed_dims)
        for f, (w, b) in enumerate([(ref_w1, ref_b1), (ref_w2, ref_b2)]):
            x = prev_image_feature[li][:, f].reshape(bs, embed_dims, hw)   # (bs, C, hw)
            want = jnp.einsum("bch,oc->bho", x, w) + b[None, None, :]      # (bs, hw, 2)
            got = a["reference_points"][:, :, f + 1, :]
            err = float(jnp.max(jnp.abs(want - got)))
            assert err < 1e-4, f"level {li} frame {f}: max abs err {err}"

    print("KERNEL_OK")
</pallas_src>

<mosaic_0001>
module attributes {stable_mosaic.version = 11 : i64} {
  func.func @_ref_proj_kernel(%arg0: i32, %arg1: i32, %arg2: i32, %arg3: memref<1x2x32xf32, #tpu.memory_space<vmem>>, %arg4: memref<1x2x1xf32, #tpu.memory_space<vmem>>, %arg5: memref<1x1x32x256xf32, #tpu.memory_space<vmem>>, %arg6: memref<1x1x2x256xf32, #tpu.memory_space<vmem>>) attributes {dimension_semantics = [#tpu.dimension_semantics<parallel>, #tpu.dimension_semantics<parallel>, #tpu.dimension_semantics<parallel>], iteration_bounds = array<i64: 2, 2, 1>, scalar_prefetch = 0 : i64, scratch_operands = 0 : i64, tpu.core_type = #tpu.core_type<tc>, window_params = [{transform_indices = @transform_0, window_bounds = array<i64: 1, 2, 32>}, {transform_indices = @transform_1, window_bounds = array<i64: 1, 2, 1>}, {transform_indices = @transform_2, window_bounds = array<i64: 1, 1, 32, 256>}, {transform_indices = @transform_3, window_bounds = array<i64: 1, 1, 2, 256>}]} {
    %c0 = arith.constant 0 : index
    %c0_0 = arith.constant 0 : index
    %c0_1 = arith.constant 0 : index
    %0 = vector.load %arg3[%c0, %c0_0, %c0_1] : memref<1x2x32xf32, #tpu.memory_space<vmem>>, vector<1x2x32xf32>
    %1 = vector.shape_cast %0 : vector<1x2x32xf32> to vector<2x32xf32>
    %c0_2 = arith.constant 0 : index
    %c0_3 = arith.constant 0 : index
    %c0_4 = arith.constant 0 : index
    %c0_5 = arith.constant 0 : index
    %2 = vector.load %arg5[%c0_2, %c0_3, %c0_4, %c0_5] : memref<1x1x32x256xf32, #tpu.memory_space<vmem>>, vector<1x1x32x256xf32>
    %3 = vector.shape_cast %2 : vector<1x1x32x256xf32> to vector<32x256xf32>
    %c0_6 = arith.constant 0 : index
    %c0_7 = arith.constant 0 : index
    %c0_8 = arith.constant 0 : index
    %4 = vector.load %arg4[%c0_6, %c0_7, %c0_8] : memref<1x2x1xf32, #tpu.memory_space<vmem>>, vector<1x2x1xf32>
    %5 = vector.shape_cast %4 : vector<1x2x1xf32> to vector<2x1xf32>
    %cst = arith.constant dense<0.000000e+00> : vector<2x256xf32>
    %6 = tpu.matmul %1, %3, %cst {dimension_numbers = #tpu.dot_dimension_numbers<[1], [0], [0], [1], [0, 0, 1, 1], [], []>} : vector<2x32xf32>, vector<32x256xf32>, vector<2x256xf32> -> vector<2x256xf32>
    %7 = vector.broadcast %5 : vector<2x1xf32> to vector<2x256xf32>
    %8 = arith.addf %6, %7 : vector<2x256xf32>
    %c0_9 = arith.constant 0 : index
    %c0_10 = arith.constant 0 : index
    %c0_11 = arith.constant 0 : index
    %c0_12 = arith.constant 0 : index
    %9 = vector.load %arg6[%c0_9, %c0_10, %c0_11, %c0_12] : memref<1x1x2x256xf32, #tpu.memory_space<vmem>>, vector<1x1x2x256xf32>
    %10 = vector.shape_cast %9 : vector<1x1x2x256xf32> to vector<2x256xf32>
    %11 = vector.shape_cast %8 : vector<2x256xf32> to vector<1x1x2x256xf32>
    tpu.vector_store %arg6[%c0_9, %c0_10, %c0_11, %c0_12], %11 {strides = array<i32>} : memref<1x1x2x256xf32, #tpu.memory_space<vmem>>, vector<1x1x2x256xf32>,
    return
  }
  func.func @transform_0(%arg0: i32, %arg1: i32, %arg2: i32) -> (i32, i32, i32) {
    %c0_i32 = arith.constant 0 : i32
    %c0_i32_0 = arith.constant 0 : i32
    %c0_i32_1 = arith.constant 0 : i32
    return %arg1, %c0_i32, %c0_i32_0 : i32, i32, i32
  }
  func.func @transform_1(%arg0: i32, %arg1: i32, %arg2: i32) -> (i32, i32, i32) {
    %c0_i32 = arith.constant 0 : i32
    %c0_i32_0 = arith.constant 0 : i32
    %c0_i32_1 = arith.constant 0 : i32
    return %arg1, %c0_i32, %c0_i32_0 : i32, i32, i32
  }
  func.func @transform_2(%arg0: i32, %arg1: i32, %arg2: i32) -> (i32, i32, i32, i32) {
    %c0_i32 = arith.constant 0 : i32
    %c0_i32_0 = arith.constant 0 : i32
    return %arg0, %arg1, %c0_i32, %arg2 : i32, i32, i32, i32
  }
  func.func @transform_3(%arg0: i32, %arg1: i32, %arg2: i32) -> (i32, i32, i32, i32) {
    %c0_i32 = arith.constant 0 : i32
    %c0_i32_0 = arith.constant 0 : i32
    return %arg0, %arg1, %c0_i32, %arg2 : i32, i32, i32, i32
  }
}

</mosaic_0001>

<llo_original>
// kernel: tpu_custom_call.1
$region0: #{tpu_custom_call.1}
  #allocation0 [shape = 'u32[]', space=smem, size = 0x4, offset = 0x4, fixed_abs, tag = 'smem constant byte address 0x4 - core index']
  #allocation1 [shape = 'u32[144,128]{1,0:T(1,128)}', space=vmem, size = 0x12000, scoped, tag = 'internal scratch']
  %s0 = inlined_call_operand.vmem [shape: f32[2,2,32], index: 0, kind: input, shape index: {}]
  %s1 = inlined_call_operand.vmem [shape: f32[2,2,1], index: 1, kind: input, shape index: {}]
  %s2 = inlined_call_operand.hbm [shape: f32[2,2,32,256], index: 2, kind: input, shape index: {}]
  %s3 = inlined_call_operand.hbm [shape: f32[2,2,2,256], index: 3, kind: output, shape index: {}]
  %s4 = sld [smem:[#allocation0]]
  $region49: #{tpu_custom_call.1} parent=0
    _
  %s6 = ssub.s32 1, %s4
  %s7 = scalar_select 0, %s6, %s4
  $region1: #{tpu_custom_call.1} parent=0
    #allocation2 [shape = 'u8[65536]{0}', space=vmem, size = 0x10000, scoped, tag = 'input window, operand 2']
    #allocation3 [shape = 's32[2]{0}', space=sflag, size = 0x8, scoped, tag = 'scoped memory for tpu_custom_call.1']
    #allocation4 [shape = 's32[2]{0}', space=sflag, size = 0x8, scoped, tag = 'scoped memory for tpu_custom_call.1']
    #allocation5 [shape = 'u8[4096]{0}', space=vmem, size = 0x1000, scoped, tag = 'output window, operand 0']
    %8 = vsyncpa [#allocation3], 0
    %s9 = scalar_lea.sflag [#allocation3], 1
    %10 = vsyncpa %s9, 0
    %11 = vsyncpa [#allocation4], 0
    %s12 = scalar_lea.sflag [#allocation4], 1
    %13 = vsyncpa %s12, 0
    loop: start=0, step=1, limit=6
    $region2: #{tpu_custom_call.1} parent=1 // loop_pre_header
      _
    $region3: #{tpu_custom_call.1} parent=1 // loop_header
      %s15 = sphi 0, %s19
      %p16 = scmp.ge.s32.totalorder %s15, 6
      %s22 = sphi 0, %s41
      %s23 = sphi 0, %s37
      %s24 = sphi 0, %s33
      %s25 = sphi 0, %s22
      %s26 = sphi 0, %s23
      %s27 = sphi 0, %s24
      %s28 = sphi 0, %s25
      %s29 = sphi 0, %s26
      %s30 = sphi 0, %s27
      %s44 = sphi 0, %s46
      %s47 = sphi 0, %s44
      %s48 = sphi 0, %s47
      %s64 = sphi 0, %s48
      %s70 = sphi 0, %s72
      %s73 = sphi 0, %s70
      %s74 = sphi 0, %s73
      %s90 = sphi 0, %s74
      %s100 = sphi 0, %s102
      %s103 = sphi 0, %s100
      %s104 = sphi 0, %s103
      %s120 = sphi 0, %s104
      %s130 = sphi 0, %s132
      %s133 = sphi 0, %s130
      %s134 = sphi 0, %s133
      %s150 = sphi 0, %s134
    $region4: #{tpu_custom_call.1} parent=1 // loop_header_branch
      %18 = sbr.rel (%p16) target = $region8
    $region5: #{tpu_custom_call.1} parent=1 // loop_body
      %s20 = ssub.s32 %s15, 1
      %s21 = ssub.s32 %s15, 2
      %s31 = sadd.s32 1, %s24
      %p32 = scmp.ge.s32.totalorder %s31, 1
      %s33 = scalar_select %p32, 0, %s31
      %s34 = sadd.s32 1, %s23
      %s35 = scalar_select %p32, %s34, %s23
      %p36 = scmp.ge.s32.totalorder %s35, 2
      %s37 = scalar_select %p36, 0, %s35
      %s38 = sadd.s32 1, %s22
      %s39 = scalar_select %p36, %s38, %s22
      %p40 = scmp.ge.s32.totalorder %s39, 2
      %s41 = scalar_select %p40, 0, %s39
      %s42 = ssub.s32 %s23, %s37
      %p43 = scmp.eq.s32.totalorder %s42, 0
      %s45 = sadd.s32 %s44, 1
      %s46 = scalar_select %p43, %s44, %s45
      %p49 = pneg %p43
      %p50 = scmp.eq.s32.totalorder %s15, 3
      %p51 = por %p49, %p50
      %p52 = scmp.ne.s32.totalorder %s44, %s47
      %p53 = scmp.eq.s32.totalorder %s15, 0
      %p54 = por %p52, %p53
      %p55 = scmp.ne.s32.totalorder %s44, %s47
      %p56 = scmp.eq.s32.totalorder %s20, 3
      %p57 = por %p55, %p56
      %p58 = scmp.ne.s32.totalorder %s47, %s48
      %p59 = scmp.eq.s32.totalorder %s20, 0
      %p60 = por %p58, %p59
      %p61 = scmp.ne.s32.totalorder %s47, %s48
      %p62 = scmp.eq.s32.totalorder %s21, 3
      %p63 = por %p61, %p62
      %p65 = scmp.ne.s32.totalorder %s48, %s64
      %p66 = scmp.eq.s32.totalorder %s21, 0
      %p67 = por %p65, %p66
      %s68 = ssub.s32 %s23, %s37
      %p69 = scmp.eq.s32.totalorder %s68, 0
      %s71 = sadd.s32 %s70, 1
      %s72 = scalar_select %p69, %s70, %s71
      %p75 = pneg %p69
      %p76 = scmp.eq.s32.totalorder %s15, 3
      %p77 = por %p75, %p76
      %p78 = scmp.ne.s32.totalorder %s70, %s73
      %p79 = scmp.eq.s32.totalorder %s15, 0
      %p80 = por %p78, %p79
      %p81 = scmp.ne.s32.totalorder %s70, %s73
      %p82 = scmp.eq.s32.totalorder %s20, 3
      %p83 = por %p81, %p82
      %p84 = scmp.ne.s32.totalorder %s73, %s74
      %p85 = scmp.eq.s32.totalorder %s20, 0
      %p86 = por %p84, %p85
      %p87 = scmp.ne.s32.totalorder %s73, %s74
      %p88 = scmp.eq.s32.totalorder %s21, 3
      %p89 = por %p87, %p88
      %p91 = scmp.ne.s32.totalorder %s74, %s90
      %p92 = scmp.eq.s32.totalorder %s21, 0
      %p93 = por %p91, %p92
      %s94 = ssub.s32 %s22, %s41
      %s95 = ssub.s32 %s23, %s37
      %s96 = sor.u32 %s94, %s95
      %s97 = ssub.s32 %s24, %s33
      %s98 = sor.u32 %s96, %s97
      %p99 = scmp.eq.s32.totalorder %s98, 0
      %s101 = sadd.s32 %s100, 1
      %s102 = scalar_select %p99, %s100, %s101
      %p105 = pneg %p99
      %p106 = scmp.eq.s32.totalorder %s15, 3
      %p107 = por %p105, %p106
      %p108 = scmp.ne.s32.totalorder %s100, %s103
      %p109 = scmp.eq.s32.totalorder %s15, 0
      %p110 = por %p108, %p109
      %p111 = scmp.ne.s32.totalorder %s100, %s103
      %p112 = scmp.eq.s32.totalorder %s20, 3
      %p113 = por %p111, %p112
      %p114 = scmp.ne.s32.totalorder %s103, %s104
      %p115 = scmp.eq.s32.totalorder %s20, 0
      %p116 = por %p114, %p115
      %p117 = scmp.ne.s32.totalorder %s103, %s104
      %p118 = scmp.eq.s32.totalorder %s21, 3
      %p119 = por %p117, %p118
      %p121 = scmp.ne.s32.totalorder %s104, %s120
      %p122 = scmp.eq.s32.totalorder %s21, 0
      %p123 = por %p121, %p122
      %s124 = ssub.s32 %s22, %s41
      %s125 = ssub.s32 %s23, %s37
      %s126 = sor.u32 %s124, %s125
      %s127 = ssub.s32 %s24, %s33
      %s128 = sor.u32 %s126, %s127
      %p129 = scmp.eq.s32.totalorder %s128, 0
      %s131 = sadd.s32 %s130, 1
      %s132 = scalar_select %p129, %s130, %s131
      %p135 = pneg %p129
      %p136 = scmp.eq.s32.totalorder %s15, 3
      %p137 = por %p135, %p136
      %p138 = scmp.ne.s32.totalorder %s130, %s133
      %p139 = scmp.eq.s32.totalorder %s15, 0
      %p140 = por %p138, %p139
      %p141 = scmp.ne.s32.totalorder %s130, %s133
      %p142 = scmp.eq.s32.totalorder %s20, 3
      %p143 = por %p141, %p142
      %p144 = scmp.ne.s32.totalorder %s133, %s134
      %p145 = scmp.eq.s32.totalorder %s20, 0
      %p146 = por %p144, %p145
      %p147 = scmp.ne.s32.totalorder %s133, %s134
      %p148 = scmp.eq.s32.totalorder %s21, 3
      %p149 = por %p147, %p148
      %p151 = scmp.ne.s32.totalorder %s134, %s150
      %p152 = scmp.eq.s32.totalorder %s21, 0
      %p153 = por %p151, %p152
      %p154 = scmp.le.s32.totalorder 1, %s15
      %p155 = scmp.lt.s32.totalorder %s15, 5
      %p156 = pnand %p154, %p155
      %p157 = pneg %p156
      // Predicated region
      $region9: #{tpu_custom_call.1} parent=5 // pred_check
        _
      $region10: #{tpu_custom_call.1} parent=5 // pred_check_branch
        %159 = sbr.rel (%p156) target = $region12
      $region11: #{tpu_custom_call.1} parent=5 // pred_region
        %s160 = ssub.s32 %s15, 1
      $region12: #{tpu_custom_call.1} parent=5 // pred_fallthru
        _
      %p161 = scmp.lt.s32.totalorder %s15, 4
      // Predicated region
      $region13: #{tpu_custom_call.1} parent=5 // pred_check
        %p162 = pneg %p161
      $region14: #{tpu_custom_call.1} parent=5 // pred_check_branch
        %164 = sbr.rel (%p162) target = $region16
      $region15: #{tpu_custom_call.1} parent=5 // pred_region
        // Predicated region
        $region17: #{tpu_custom_call.1} parent=15 // pred_check
          %p165 = pneg %p54
        $region18: #{tpu_custom_call.1} parent=15 // pred_check_branch
          %167 = sbr.rel (%p165) target = $region20
        $region19: #{tpu_custom_call.1} parent=15 // pred_region
          %p168 = scmp.lt.s32.totalorder %s23, 1
          %s169 = scalar_select %p168, %s23, 1
          %s170 = smul.addr %s169, 2
          %s171 = scalar_lea.vmem %s0, %s170
        $region20: #{tpu_custom_call.1} parent=15 // pred_fallthru
          _
        // Predicated region
        $region21: #{tpu_custom_call.1} parent=15 // pred_check
          %p172 = pneg %p80
        $region22: #{tpu_custom_call.1} parent=15 // pred_check_branch
          %174 = sbr.rel (%p172) target = $region24
        $region23: #{tpu_custom_call.1} parent=15 // pred_region
          %p175 = scmp.lt.s32.totalorder %s23, 1
          %s176 = scalar_select %p175, %s23, 1
          %s177 = smul.addr %s176, 2
          %s178 = scalar_lea.vmem %s1, %s177
        $region24: #{tpu_custom_call.1} parent=15 // pred_fallthru
          _
        // Predicated region
        $region25: #{tpu_custom_call.1} parent=15 // pred_check
          %p179 = pneg %p110
        $region26: #{tpu_custom_call.1} parent=15 // pred_check_branch
          %181 = sbr.rel (%p179) target = $region28
        $region27: #{tpu_custom_call.1} parent=15 // pred_region
          %s182 = sand.u32 %s100, 1
          %s183 = scalar_lea.sflag [#allocation3], %s182
          %s184 = sand.u32 %s100, 1
          %s185 = smul.addr %s184, 64
          %s186 = scalar_lea.vmem [#allocation2], %s185
          %s187 = smul.u32 2, %s24
          %s189 = ssub.s32 1024, 1024
          %190 = vsyncadd %s183, %s189
          %s191 = smul.addr %s23, 8
          %s192 = sadd.s32 %s187, %s191
          %s193 = smul.addr %s22, 16
          %s194 = sadd.s32 %s192, %s193
          %s195 = smul.addr %s194, 128
          %s196 = scalar_lea.hbm %s2, %s195
          %s197 = sshll.u32 %s186, 4
          %s198 = int_to_ptr.vmem [resolvable:$true] %s197
          %203 = dma.hbm_to_vmem [thread:$0]  %s196, 1024, %s198, %s183, 256, 256, 16
        $region28: #{tpu_custom_call.1} parent=15 // pred_fallthru
          _
      $region16: #{tpu_custom_call.1} parent=5 // pred_fallthru
        _
      %p204 = scmp.le.s32.totalorder 1, %s15
      %p205 = scmp.lt.s32.totalorder %s15, 5
      %p206 = pnand %p204, %p205
      %p207 = pneg %p206
      // Predicated region
      $region29: #{tpu_custom_call.1} parent=5 // pred_check
        _
      $region30: #{tpu_custom_call.1} parent=5 // pred_check_branch
        %209 = sbr.rel (%p206) target = $region32
      $region31: #{tpu_custom_call.1} parent=5 // pred_region
        %s210 = ssub.s32 %s15, 1
        %s211 = sand.u32 %s103, 1
        %s212 = scalar_lea.sflag [#allocation3], %s211
        %s213 = sand.u32 %s103, 1
        %s214 = smul.addr %s213, 64
        %s215 = scalar_lea.vmem [#allocation2], %s214
        // Predicated region
        $region33: #{tpu_custom_call.1} parent=31 // pred_check
          %p216 = pneg %p116
        $region34: #{tpu_custom_call.1} parent=31 // pred_check_branch
          %218 = sbr.rel (%p216) target = $region36
        $region35: #{tpu_custom_call.1} parent=31 // pred_region
          %219 = dma.done %s212, 1024
        $region36: #{tpu_custom_call.1} parent=31 // pred_fallthru
          _
        %p220 = scmp.lt.s32.totalorder %s26, 1
        %s221 = scalar_select %p220, %s26, 1
        %s222 = smul.addr %s221, 2
        %s223 = scalar_lea.vmem %s0, %s222
        %p224 = pneg %p60
        %p225 = pneg %p57
        %p226 = scmp.lt.s32.totalorder %s26, 1
        %s227 = scalar_select %p226, %s26, 1
        %s228 = smul.addr %s227, 2
        %s229 = scalar_lea.vmem %s1, %s228
        %p230 = pneg %p86
        %p231 = pneg %p83
        %s232 = sand.u32 %s103, 1
        %s233 = scalar_lea.sflag [#allocation3], %s232
        %s234 = sand.u32 %s103, 1
        %s235 = smul.addr %s234, 64
        %s236 = scalar_lea.vmem [#allocation2], %s235
        %p237 = pneg %p116
        %p238 = pneg %p113
        %p239 = pneg %p146
        %p240 = pneg %p143
        %s241 = sand.u32 %s133, 1
        %s242 = scalar_lea.sflag [#allocation4], %s241
        %s243 = sand.u32 %s133, 1
        %s244 = smul.addr %s243, 4
        %s245 = scalar_lea.vmem [#allocation5], %s244
        %p246 = scmp.lt.s32.totalorder %s26, 1
        %s247 = scalar_select %p246, %s26, 1
        %s248 = smul.addr %s247, 2
        %s249 = scalar_lea.vmem %s0, %s248
        %p250 = scmp.lt.s32.totalorder %s26, 1
        %s251 = scalar_select %p250, %s26, 1
        %s252 = smul.addr %s251, 2
        %s253 = scalar_lea.vmem %s1, %s252
        %s254 = smul.u32 2, %s27
        %s255 = smul.u32 2, %s27
        %v256 = vld [vmem:[%s249] sm:$0x3]
        %v257 = vld [vmem:[%s215] sm:$0xff]
        %v258 = vld [vmem:[%s215 + $0x8] sm:$0xff]
        %v259 = vld [vmem:[%s215 + $0x10] sm:$0xff]
        %v260 = vld [vmem:[%s215 + $0x18] sm:$0xff]
        %v261 = vld [vmem:[%s215 + $0x20] sm:$0xff]
        %v262 = vld [vmem:[%s215 + $0x28] sm:$0xff]
        %v263 = vld [vmem:[%s215 + $0x30] sm:$0xff]
        %v264 = vld [vmem:[%s215 + $0x38] sm:$0xff]
        %v265 = vld [vmem:[%s253] sm:$0x3]
        %267 = vset.pattern.permute.xlu0 0
        %268 = vperm.xlu0 %267, %v265
        %v269 = vpop.permute.xlu0 %268
        %vm271 = vcmask 261120
        %v273 = vsel %vm271, %v256, 0
        %275 = vmatprep.subr.mxu0 %v258
        %276 = vmatpush1.msra.mxu0 %v257
        %277 = vmatprep.subr.mxu0 %v260
        %278 = vmatpush1.msra.mxu0 %v259
        %279 = vmatprep.subr.mxu0 %v262
        %280 = vmatpush1.msra.mxu0 %v261
        %281 = vmatprep.subr.mxu0 %v264
        %282 = vmatpush1.msra.mxu0 %v263
        %283 = vmatprep.subr.mxu0 0.0
        %284 = vmatpush1.msra.mxu0 0.0
        %285 = vmatprep.subr.mxu0 0.0
        %286 = vmatpush1.msra.mxu0 0.0
        %287 = vmatprep.subr.mxu0 0.0
        %288 = vmatpush1.msra.mxu0 0.0
        %289 = vmatprep.subr.mxu0 0.0
        %290 = vmatpush1.msra.mxu0 0.0
        %291 = vmatprep.subr.mxu0 0.0
        %292 = vmatpush1.msra.mxu0 0.0
        %293 = vmatprep.subr.mxu0 0.0
        %294 = vmatpush1.msra.mxu0 0.0
        %295 = vmatprep.subr.mxu0 0.0
        %296 = vmatpush1.msra.mxu0 0.0
        %297 = vmatprep.subr.mxu0 0.0
        %298 = vmatpush1.msra.mxu0 0.0
        %299 = vmatprep.subr.mxu0 0.0
        %300 = vmatpush1.msra.mxu0 0.0
        %301 = vmatprep.subr.mxu0 0.0
        %302 = vmatpush1.msra.mxu0 0.0
        %303 = vmatprep.subr.mxu0 0.0
        %304 = vmatpush1.msra.mxu0 0.0
        %305 = vmatprep.subr.mxu0 0.0
        %306 = vmatpush1.msra.mxu0 0.0
        %307 = vmatprep.subr.mxu0 0.0
        %308 = vmatpush1.msra.mxu0 0.0
        %309 = vmatprep.subr.mxu0 0.0
        %310 = vmatpush1.msra.mxu0 0.0
        %311 = vmatprep.subr.mxu0 0.0
        %312 = vmatpush1.msra.mxu0 0.0
        %313 = vmatprep.subr.mxu0 0.0
        %314 = vmatpush1.msra.mxu0 0.0
        %315 = vmatprep.subr.mxu0 0.0
        %316 = vmatpush1.msra.mxu0 0.0
        %317 = vmatprep.subr.mxu0 0.0
        %318 = vmatpush1.msra.mxu0 0.0
        %319 = vmatprep.subr.mxu0 0.0
        %320 = vmatpush1.msra.mxu0 0.0
        %321 = vmatprep.subr.mxu0 0.0
        %322 = vmatpush1.msra.mxu0 0.0
        %323 = vmatprep.subr.mxu0 0.0
        %324 = vmatpush1.msra.mxu0 0.0
        %325 = vmatprep.subr.mxu0 0.0
        %326 = vmatpush1.msra.mxu0 0.0
        %327 = vmatprep.subr.mxu0 0.0
        %328 = vmatpush1.msra.mxu0 0.0
        %329 = vmatprep.subr.mxu0 0.0
        %330 = vmatpush1.msra.mxu0 0.0
        %331 = vmatprep.subr.mxu0 0.0
        %332 = vmatpush1.msra.mxu0 0.0
        %333 = vmatprep.subr.mxu0 0.0
        %334 = vmatpush1.msra.mxu0 0.0
        %335 = vmatprep.subr.mxu0 0.0
        %336 = vmatpush1.msra.mxu0 0.0
        %337 = vmatprep.subr.mxu0 0.0
        %338 = vmatpush1.msra.mxu0 0.0
        %339 = vmatprep.mubr.f32.mxu0 0.0
        %340 = vmatmul.mubr.f32.gmra.mrb[0].mxu0 %v273
        %v341 = vpop.f32.mrb[0].mxu0
        %v342 = vadd.f32 %v269, %v341
        %v343 = vpop.f32.mrb[0].mxu0
        %v344 = vadd.f32 %v269, %v343
        %345 = vdwg.mxu0
        %v348 = vcombine.low %v342, %v344
        %v350 = vunpack.c.l.s4 1983009808
        %v351 = vunpack.c.0.s8 %v350
        %v352 = vlaneseq
        %v353 = vshrl.u32 %v352, 7
        %v354 = vsub.s32 %v351, %v353
        %v355 = vrot.slane %v348, %v354
        %357 = vst [vmem:[%s245] sm:$0xf] %v355
        %s358 = sand.u32 %s133, 1
        %s359 = scalar_lea.sflag [#allocation4], %s358
        %s360 = sand.u32 %s133, 1
        %s361 = smul.addr %s360, 4
        %s362 = scalar_lea.vmem [#allocation5], %s361
        // Predicated region
        $region37: #{tpu_custom_call.1} parent=31 // pred_check
          %p363 = pneg %p143
        $region38: #{tpu_custom_call.1} parent=31 // pred_check_branch
          %365 = sbr.rel (%p363) target = $region40
        $region39: #{tpu_custom_call.1} parent=31 // pred_region
          %s366 = smul.u32 2, %s27
          %s368 = ssub.s32 64, 64
          %369 = vsyncadd %s359, %s368
          %s370 = smul.addr %s26, 2
          %s371 = sadd.s32 %s366, %s370
          %s372 = smul.addr %s25, 4
          %s373 = sadd.s32 %s371, %s372
          %s374 = smul.addr %s373, 32
          %s375 = scalar_lea.hbm %s3, %s374
          %s377 = sshll.u32 %s362, 4
          %s378 = int_to_ptr.vmem [resolvable:$true] %s377
          %380 = dma.vmem_to_hbm [thread:$0]  %s378, 64, %s375, %s359
        $region40: #{tpu_custom_call.1} parent=31 // pred_fallthru
          _
      $region32: #{tpu_custom_call.1} parent=5 // pred_fallthru
        _
      %p381 = scmp.le.s32.totalorder 2, %s15
      // Predicated region
      $region41: #{tpu_custom_call.1} parent=5 // pred_check
        %p382 = pneg %p381
      $region42: #{tpu_custom_call.1} parent=5 // pred_check_branch
        %384 = sbr.rel (%p382) target = $region44
      $region43: #{tpu_custom_call.1} parent=5 // pred_region
        %s385 = ssub.s32 %s15, 2
        // Predicated region
        $region45: #{tpu_custom_call.1} parent=43 // pred_check
          %p386 = pneg %p149
        $region46: #{tpu_custom_call.1} parent=43 // pred_check_branch
          %388 = sbr.rel (%p386) target = $region48
        $region47: #{tpu_custom_call.1} parent=43 // pred_region
          %s389 = sand.u32 %s134, 1
          %s390 = scalar_lea.sflag [#allocation4], %s389
          %s391 = sand.u32 %s134, 1
          %s392 = smul.addr %s391, 4
          %s393 = scalar_lea.vmem [#allocation5], %s392
          %394 = dma.done %s390, 64
        $region48: #{tpu_custom_call.1} parent=43 // pred_fallthru
          _
      $region44: #{tpu_custom_call.1} parent=5 // pred_fallthru
        _
    $region6: #{tpu_custom_call.1} parent=1 // loop_footer
      %s19 = sadd.s32 1, %s15
    $region7: #{tpu_custom_call.1} parent=1 // loop_footer_branch
      %14 = sbr.rel target = $region3
    $region8: #{tpu_custom_call.1} parent=1 // loop_exit
      _
    %395 = vsyncpa [#allocation3], 1
    %s396 = scalar_lea.sflag [#allocation3], 1
    %397 = vsyncpa %s396, 1
    %398 = vsyncpa [#allocation4], 1
    %s399 = scalar_lea.sflag [#allocation4], 1
    %400 = vsyncpa %s399, 1

</llo_original>
